<compile_context>
chip_gen: v7x
topology: tpu7x:2x2x1
jax: 0.10.0
libtpu: 0.0.40
codegen_flags: <defaults>
</compile_context>

<pallas_src>
import jax
import jax.numpy as jnp
from jax import lax
from jax.experimental import pallas as pl
from jax.experimental.pallas import tpu as pltpu

INPUT_SIZE = 12
HIDDEN_SIZE = 10
OUTPUT_SIZE = 1

# (tile_b, 12) x-block pads to 128 lanes in VMEM => tile_b * 512 B per buffer.
# 16K lanes -> 8 MiB per buffer, 16 MiB double-buffered: fits the 32 MiB scoped
# VMEM cap on every generation (v7x is the binding constraint).
MAX_TILE_B = 16 * 1024
VMEM_LIMIT_BYTES = 32 << 20


def mlp_kernel(x_ref, w1t_ref, b1_ref, w2t_ref, b2_ref, o_ref):
    # x_ref:   (TILE_B, 12)  -- untransposed HBM layout, contiguous DMA rows
    # w1t_ref: (10, 12)
    # b1_ref:  (10, 1)
    # w2t_ref: (1, 10)
    # b2_ref:  (1, 1)
    # o_ref:   (1, TILE_B)   -- batch on lanes, lane-dense stores
    x = x_ref[...]

    # Layer 1 on the MXU ("NT" contraction over the 12-wide feature dim of both
    # operands): (10,12) x (TILE_B,12)^T -> (10, TILE_B).  The on-chip relayout
    # of the x block overlaps with the next tile's DMA.
    h = lax.dot_general(
        w1t_ref[...], x,
        dimension_numbers=(((1,), (1,)), ((), ())),
        preferred_element_type=jnp.float32)
    h = jnp.maximum(h + b1_ref[...], 0.0)  # bias broadcast over lanes + ReLU

    # Layer 2 also on the MXU: (1,10) @ (10,TILE_B) -> (1, TILE_B).
    y = jnp.dot(w2t_ref[...], h, preferred_element_type=jnp.float32) + b2_ref[...]
    o_ref[...] = y.astype(o_ref.dtype)


def _pick_tile_b(batch: int) -> int:
    # Power-of-two bucketing (avoids a fresh Mosaic compile for every distinct
    # batch size) and >= 2 grid steps for large batches so the "parallel" axis
    # actually shards across v7x's two TensorCores.
    half = max(pl.cdiv(batch, 2), 1)
    return min(MAX_TILE_B, max(128, pl.next_power_of_2(half)))


def regression_model_forward(x, w1, b1, w2, b2):
    """x: (B, 12); w1: (12, 10); b1: (10,); w2: (10, 1); b2: (1,). Returns (B, 1)."""
    B = x.shape[0]
    tile_b = _pick_tile_b(B)
    grid_b = pl.cdiv(B, tile_b)

    w1_t = jnp.transpose(w1)                                     # (10, 12)
    b1_c = b1.reshape(HIDDEN_SIZE, 1)                            # (10, 1)
    w2_t = jnp.transpose(w2.reshape(HIDDEN_SIZE, OUTPUT_SIZE))   # (1, 10)
    b2_c = b2.reshape(OUTPUT_SIZE, 1)                            # (1, 1)

    y_t = pl.pallas_call(
        mlp_kernel,
        out_shape=jax.ShapeDtypeStruct((OUTPUT_SIZE, B), jnp.float32),
        grid_spec=pl.GridSpec(
            grid=(grid_b,),
            in_specs=[
                pl.BlockSpec((tile_b, INPUT_SIZE), lambda i: (i, 0)),
                pl.BlockSpec((HIDDEN_SIZE, INPUT_SIZE), lambda i: (0, 0)),
                pl.BlockSpec((HIDDEN_SIZE, 1), lambda i: (0, 0)),
                pl.BlockSpec((OUTPUT_SIZE, HIDDEN_SIZE), lambda i: (0, 0)),
                pl.BlockSpec((OUTPUT_SIZE, 1), lambda i: (0, 0)),
            ],
            out_specs=pl.BlockSpec((OUTPUT_SIZE, tile_b), lambda i: (0, i)),
        ),
        compiler_params=pltpu.CompilerParams(
            dimension_semantics=("parallel",),
            vmem_limit_bytes=VMEM_LIMIT_BYTES),
    )(x, w1_t, b1_c, w2_t, b2_c)

    # (1, B) row-major == (B, 1) row-major: free relayout back to the PyTorch shape.
    return y_t.reshape(B, OUTPUT_SIZE)


def init_params(key):
    # Deterministic init mimicking nn.Linear defaults: U(-1/sqrt(fan_in), 1/sqrt(fan_in)).
    k1, k2, k3, k4 = jax.random.split(key, 4)
    bound1 = 1.0 / jnp.sqrt(INPUT_SIZE)
    bound2 = 1.0 / jnp.sqrt(HIDDEN_SIZE)
    w1 = jax.random.uniform(k1, (INPUT_SIZE, HIDDEN_SIZE), jnp.float32, -bound1, bound1)
    b1 = jax.random.uniform(k2, (HIDDEN_SIZE,), jnp.float32, -bound1, bound1)
    w2 = jax.random.uniform(k3, (HIDDEN_SIZE, OUTPUT_SIZE), jnp.float32, -bound2, bound2)
    b2 = jax.random.uniform(k4, (OUTPUT_SIZE,), jnp.float32, -bound2, bound2)
    return w1, b1, w2, b2


if __name__ == "__main__":
    key = jax.random.PRNGKey(0)
    kx, kp = jax.random.split(key)
    batch = 8
    x = jax.random.normal(kx, (batch, INPUT_SIZE), jnp.float32)
    w1, b1, w2, b2 = init_params(kp)

    y = jax.block_until_ready(regression_model_forward(x, w1, b1, w2, b2))

    # Pure-JAX reference check.
    ref = jnp.maximum(x @ w1 + b1, 0.0) @ w2 + b2
    assert y.shape == (batch, OUTPUT_SIZE), y.shape
    assert jnp.allclose(y, ref, atol=1e-5, rtol=1e-5), float(jnp.max(jnp.abs(y - ref)))

    # Ragged batch (not a multiple of 128 / tile_b): exercises the clipped last block.
    batch2 = 300
    x2 = jax.random.normal(jax.random.PRNGKey(7), (batch2, INPUT_SIZE), jnp.float32)
    y2 = jax.block_until_ready(regression_model_forward(x2, w1, b1, w2, b2))
    ref2 = jnp.maximum(x2 @ w1 + b1, 0.0) @ w2 + b2
    assert y2.shape == (batch2, OUTPUT_SIZE), y2.shape
    assert jnp.allclose(y2, ref2, atol=1e-5, rtol=1e-5), float(jnp.max(jnp.abs(y2 - ref2)))

    print("KERNEL_OK")
</pallas_src>

<mosaic_0001>
module attributes {stable_mosaic.version = 11 : i64} {
  func.func @mlp_kernel(%arg0: i32, %arg1: memref<128x12xf32, #tpu.memory_space<vmem>>, %arg2: memref<10x12xf32, #tpu.memory_space<vmem>>, %arg3: memref<10x1xf32, #tpu.memory_space<vmem>>, %arg4: memref<1x10xf32, #tpu.memory_space<vmem>>, %arg5: memref<1x1xf32, #tpu.memory_space<vmem>>, %arg6: memref<1x128xf32, #tpu.memory_space<vmem>>) attributes {dimension_semantics = [#tpu.dimension_semantics<parallel>], iteration_bounds = array<i64: 1>, scalar_prefetch = 0 : i64, scratch_operands = 0 : i64, tpu.core_type = #tpu.core_type<tc>, window_params = [{transform_indices = @transform_0, window_bounds = array<i64: 128, 12>}, {pipeline_mode = #tpu.pipeline_mode<synchronous>, transform_indices = @transform_1, window_bounds = array<i64: 10, 12>}, {pipeline_mode = #tpu.pipeline_mode<synchronous>, transform_indices = @transform_2, window_bounds = array<i64: 10, 1>}, {pipeline_mode = #tpu.pipeline_mode<synchronous>, transform_indices = @transform_3, window_bounds = array<i64: 1, 10>}, {pipeline_mode = #tpu.pipeline_mode<synchronous>, transform_indices = @transform_4, window_bounds = array<i64: 1, 1>}, {transform_indices = @transform_5, window_bounds = array<i64: 1, 128>}]} {
    %c0 = arith.constant 0 : index
    %c0_0 = arith.constant 0 : index
    %0 = vector.load %arg1[%c0, %c0_0] : memref<128x12xf32, #tpu.memory_space<vmem>>, vector<128x12xf32>
    %c0_1 = arith.constant 0 : index
    %c0_2 = arith.constant 0 : index
    %1 = vector.load %arg2[%c0_1, %c0_2] : memref<10x12xf32, #tpu.memory_space<vmem>>, vector<10x12xf32>
    %cst = arith.constant dense<0.000000e+00> : vector<10x128xf32>
    %2 = tpu.matmul %1, %0, %cst {dimension_numbers = #tpu.dot_dimension_numbers<[1], [1], [0], [0], [0, 0, 1, 0], [], []>} : vector<10x12xf32>, vector<128x12xf32>, vector<10x128xf32> -> vector<10x128xf32>
    %c0_3 = arith.constant 0 : index
    %c0_4 = arith.constant 0 : index
    %3 = vector.load %arg3[%c0_3, %c0_4] : memref<10x1xf32, #tpu.memory_space<vmem>>, vector<10x1xf32>
    %4 = vector.broadcast %3 : vector<10x1xf32> to vector<10x128xf32>
    %5 = arith.addf %2, %4 : vector<10x128xf32>
    %cst_5 = arith.constant 0.000000e+00 : f32
    %6 = vector.broadcast %cst_5 : f32 to vector<10x128xf32>
    %7 = arith.maximumf %5, %6 : vector<10x128xf32>
    %c0_6 = arith.constant 0 : index
    %c0_7 = arith.constant 0 : index
    %8 = vector.load %arg4[%c0_6, %c0_7] : memref<1x10xf32, #tpu.memory_space<vmem>>, vector<1x10xf32>
    %cst_8 = arith.constant dense<0.000000e+00> : vector<1x128xf32>
    %9 = tpu.matmul %8, %7, %cst_8 {dimension_numbers = #tpu.dot_dimension_numbers<[1], [0], [0], [1], [0, 0, 1, 1], [], []>} : vector<1x10xf32>, vector<10x128xf32>, vector<1x128xf32> -> vector<1x128xf32>
    %c0_9 = arith.constant 0 : index
    %c0_10 = arith.constant 0 : index
    %10 = vector.load %arg5[%c0_9, %c0_10] : memref<1x1xf32, #tpu.memory_space<vmem>>, vector<1x1xf32>
    %11 = vector.broadcast %10 : vector<1x1xf32> to vector<1x128xf32>
    %12 = arith.addf %9, %11 : vector<1x128xf32>
    %c0_11 = arith.constant 0 : index
    %c0_12 = arith.constant 0 : index
    %13 = vector.load %arg6[%c0_11, %c0_12] : memref<1x128xf32, #tpu.memory_space<vmem>>, vector<1x128xf32>
    tpu.vector_store %arg6[%c0_11, %c0_12], %12 {strides = array<i32>} : memref<1x128xf32, #tpu.memory_space<vmem>>, vector<1x128xf32>,
    return
  }
  func.func @transform_0(%arg0: i32) -> (i32, i32) {
    %c0_i32 = arith.constant 0 : i32
    %c0_i32_0 = arith.constant 0 : i32
    return %arg0, %c0_i32 : i32, i32
  }
  func.func @transform_1(%arg0: i32) -> (i32, i32) {
    %c0_i32 = arith.constant 0 : i32
    %c0_i32_0 = arith.constant 0 : i32
    %c0_i32_1 = arith.constant 0 : i32
    return %c0_i32, %c0_i32_0 : i32, i32
  }
  func.func @transform_2(%arg0: i32) -> (i32, i32) {
    %c0_i32 = arith.constant 0 : i32
    %c0_i32_0 = arith.constant 0 : i32
    %c0_i32_1 = arith.constant 0 : i32
    return %c0_i32, %c0_i32_0 : i32, i32
  }
  func.func @transform_3(%arg0: i32) -> (i32, i32) {
    %c0_i32 = arith.constant 0 : i32
    %c0_i32_0 = arith.constant 0 : i32
    %c0_i32_1 = arith.constant 0 : i32
    return %c0_i32, %c0_i32_0 : i32, i32
  }
  func.func @transform_4(%arg0: i32) -> (i32, i32) {
    %c0_i32 = arith.constant 0 : i32
    %c0_i32_0 = arith.constant 0 : i32
    %c0_i32_1 = arith.constant 0 : i32
    return %c0_i32, %c0_i32_0 : i32, i32
  }
  func.func @transform_5(%arg0: i32) -> (i32, i32) {
    %c0_i32 = arith.constant 0 : i32
    %c0_i32_0 = arith.constant 0 : i32
    return %c0_i32, %arg0 : i32, i32
  }
}

</mosaic_0001>

<llo_original>
// kernel: tpu_custom_call.1
$region0: #{tpu_custom_call.1}
  #allocation0 [shape = 'u32[]', space=smem, size = 0x4, offset = 0x4, fixed_abs, tag = 'smem constant byte address 0x4 - core index']
  #allocation1 [shape = 'u32[144,128]{1,0:T(1,128)}', space=vmem, size = 0x12000, scoped, tag = 'internal scratch']
  #allocation2 [shape = 'f32[1,1]{1,0:T(1,128)S(1)}', space=vmem, size = 0x200, scoped, tag = 'scoped memory for tpu_custom_call.1']
  %s0 = inlined_call_operand.vmem [shape: f32[8,12], index: 0, kind: input, shape index: {}]
  %s1 = inlined_call_operand.vmem [shape: f32[10,12], index: 1, kind: input, shape index: {}]
  %s2 = inlined_call_operand.vmem [shape: f32[10,1], index: 2, kind: input, shape index: {}]
  %s3 = inlined_call_operand.vmem [shape: f32[1,10], index: 3, kind: input, shape index: {}]
  %s4 = inlined_call_operand.<no memory space> [shape: f32[1,1], index: 4, kind: input, shape index: {}]
  %s5 = inlined_call_operand.hbm [shape: f32[1,8], index: 5, kind: output, shape index: {}]
  %s6 = sld [smem:[#allocation0]]
  $region30: #{tpu_custom_call.1} parent=0
    _
  %s8 = ssub.s32 1, %s6
  %s9 = scalar_select 0, %s8, %s6
  %v10 = vstv %s4
  %11 = vst [vmem:[#allocation2] sm:$0x1] %v10
  $region1: #{tpu_custom_call.1} parent=0
    #allocation3 [shape = 'u8[512]{0}', space=vmem, size = 0x400, scoped, tag = 'output window, operand 0, single buffered']
    #allocation4 [shape = 's32[1]{0}', space=sflag, size = 0x4, scoped, tag = 'scoped memory for tpu_custom_call.1']
    %12 = vsyncpa [#allocation4], 0
    // Predicated region
    $region2: #{tpu_custom_call.1} parent=1 // pred_check
      _
    $region3: #{tpu_custom_call.1} parent=1 // pred_check_branch
      %14 = sbr.rel (0) target = $region5
    $region4: #{tpu_custom_call.1} parent=1 // pred_region
      _
    $region5: #{tpu_custom_call.1} parent=1 // pred_fallthru
      _
    // Predicated region
    $region6: #{tpu_custom_call.1} parent=1 // pred_check
      _
    $region7: #{tpu_custom_call.1} parent=1 // pred_check_branch
      %16 = sbr.rel (0) target = $region9
    $region8: #{tpu_custom_call.1} parent=1 // pred_region
      _
    $region9: #{tpu_custom_call.1} parent=1 // pred_fallthru
      _
    // Predicated region
    $region10: #{tpu_custom_call.1} parent=1 // pred_check
      _
    $region11: #{tpu_custom_call.1} parent=1 // pred_check_branch
      %18 = sbr.rel (0) target = $region13
    $region12: #{tpu_custom_call.1} parent=1 // pred_region
      _
    $region13: #{tpu_custom_call.1} parent=1 // pred_fallthru
      _
    // Predicated region
    $region14: #{tpu_custom_call.1} parent=1 // pred_check
      _
    $region15: #{tpu_custom_call.1} parent=1 // pred_check_branch
      %20 = sbr.rel (0) target = $region17
    $region16: #{tpu_custom_call.1} parent=1 // pred_region
      _
    $region17: #{tpu_custom_call.1} parent=1 // pred_fallthru
      _
    // Predicated region
    $region18: #{tpu_custom_call.1} parent=1 // pred_check
      _
    $region19: #{tpu_custom_call.1} parent=1 // pred_check_branch
      %22 = sbr.rel (0) target = $region21
    $region20: #{tpu_custom_call.1} parent=1 // pred_region
      _
    $region21: #{tpu_custom_call.1} parent=1 // pred_fallthru
      _
    %v23 = vld [vmem:[%s0] sm:$0xff]
    %v24 = vld [vmem:[%s0 + $0x8] sm:$0xff]
    %v25 = vld [vmem:[%s0 + $0x10] sm:$0xff]
    %v26 = vld [vmem:[%s0 + $0x18] sm:$0xff]
    %v27 = vld [vmem:[%s0 + $0x20] sm:$0xff]
    %v28 = vld [vmem:[%s0 + $0x28] sm:$0xff]
    %v29 = vld [vmem:[%s0 + $0x30] sm:$0xff]
    %v30 = vld [vmem:[%s0 + $0x38] sm:$0xff]
    %v31 = vld [vmem:[%s0 + $0x40] sm:$0xff]
    %v32 = vld [vmem:[%s0 + $0x48] sm:$0xff]
    %v33 = vld [vmem:[%s0 + $0x50] sm:$0xff]
    %v34 = vld [vmem:[%s0 + $0x58] sm:$0xff]
    %v35 = vld [vmem:[%s0 + $0x60] sm:$0xff]
    %v36 = vld [vmem:[%s0 + $0x68] sm:$0xff]
    %v37 = vld [vmem:[%s0 + $0x70] sm:$0xff]
    %v38 = vld [vmem:[%s0 + $0x78] sm:$0xff]
    %v39 = vld [vmem:[%s1] sm:$0xff]
    %v40 = vld [vmem:[%s1 + $0x8] sm:$0x3]
    %v41 = vld [vmem:[%s2] sm:$0xff]
    %v42 = vld [vmem:[%s2 + $0x8] sm:$0x3]
    %44 = vset.pattern.permute.xlu0 0
    %45 = vperm.xlu0 %44, %v41
    %v46 = vpop.permute.xlu0 %45
    %49 = vset.pattern.permute.xlu0 0
    %50 = vperm.xlu0 %49, %v42
    %v51 = vpop.permute.xlu0 %50
    %vm53 = vcmask 97280
    %v55 = vsel %vm53, %v39, 0
    %v58 = vsel %vm53, %v40, 0
    %v61 = vsel %vm53, %v23, 0
    %v64 = vsel %vm53, %v24, 0
    %v67 = vsel %vm53, %v25, 0
    %v70 = vsel %vm53, %v26, 0
    %v73 = vsel %vm53, %v27, 0
    %v76 = vsel %vm53, %v28, 0
    %v79 = vsel %vm53, %v29, 0
    %v82 = vsel %vm53, %v30, 0
    %v85 = vsel %vm53, %v31, 0
    %v88 = vsel %vm53, %v32, 0
    %v91 = vsel %vm53, %v33, 0
    %v94 = vsel %vm53, %v34, 0
    %v97 = vsel %vm53, %v35, 0
    %v100 = vsel %vm53, %v36, 0
    %v103 = vsel %vm53, %v37, 0
    %v106 = vsel %vm53, %v38, 0
    %108 = vmatprep.subr.mxu0 0.0
    %109 = vmatpush1.xpose.msra.mxu0 %v61
    %110 = vmatprep.subr.mxu0 0.0
    %111 = vmatpush1.xpose.msra.mxu0 %v64
    %112 = vmatprep.subr.mxu0 0.0
    %113 = vmatpush1.xpose.msra.mxu0 %v67
    %114 = vmatprep.subr.mxu0 0.0
    %115 = vmatpush1.xpose.msra.mxu0 %v70
    %116 = vmatprep.subr.mxu0 0.0
    %117 = vmatpush1.xpose.msra.mxu0 %v73
    %118 = vmatprep.subr.mxu0 0.0
    %119 = vmatpush1.xpose.msra.mxu0 %v76
    %120 = vmatprep.subr.mxu0 0.0
    %121 = vmatpush1.xpose.msra.mxu0 %v79
    %122 = vmatprep.subr.mxu0 0.0
    %123 = vmatpush1.xpose.msra.mxu0 %v82
    %124 = vmatprep.subr.mxu0 0.0
    %125 = vmatpush1.xpose.msra.mxu0 %v85
    %126 = vmatprep.subr.mxu0 0.0
    %127 = vmatpush1.xpose.msra.mxu0 %v88
    %128 = vmatprep.subr.mxu0 0.0
    %129 = vmatpush1.xpose.msra.mxu0 %v91
    %130 = vmatprep.subr.mxu0 0.0
    %131 = vmatpush1.xpose.msra.mxu0 %v94
    %132 = vmatprep.subr.mxu0 0.0
    %133 = vmatpush1.xpose.msra.mxu0 %v97
    %134 = vmatprep.subr.mxu0 0.0
    %135 = vmatpush1.xpose.msra.mxu0 %v100
    %136 = vmatprep.subr.mxu0 0.0
    %137 = vmatpush1.xpose.msra.mxu0 %v103
    %138 = vmatprep.subr.mxu0 0.0
    %139 = vmatpush1.xpose.msra.mxu0 %v106
    %140 = vmatprep.subr.mxu0 0.0
    %141 = vmatpush1.xpose.msra.mxu0 0.0
    %142 = vmatprep.subr.mxu0 0.0
    %143 = vmatpush1.xpose.msra.mxu0 0.0
    %144 = vmatprep.subr.mxu0 0.0
    %145 = vmatpush1.xpose.msra.mxu0 0.0
    %146 = vmatprep.subr.mxu0 0.0
    %147 = vmatpush1.xpose.msra.mxu0 0.0
    %148 = vmatprep.subr.mxu0 0.0
    %149 = vmatpush1.xpose.msra.mxu0 0.0
    %150 = vmatprep.subr.mxu0 0.0
    %151 = vmatpush1.xpose.msra.mxu0 0.0
    %152 = vmatprep.subr.mxu0 0.0
    %153 = vmatpush1.xpose.msra.mxu0 0.0
    %154 = vmatprep.subr.mxu0 0.0
    %155 = vmatpush1.xpose.msra.mxu0 0.0
    %156 = vmatprep.subr.mxu0 0.0
    %157 = vmatpush1.xpose.msra.mxu0 0.0
    %158 = vmatprep.subr.mxu0 0.0
    %159 = vmatpush1.xpose.msra.mxu0 0.0
    %160 = vmatprep.subr.mxu0 0.0
    %161 = vmatpush1.xpose.msra.mxu0 0.0
    %162 = vmatprep.subr.mxu0 0.0
    %163 = vmatpush1.xpose.msra.mxu0 0.0
    %164 = vmatprep.subr.mxu0 0.0
    %165 = vmatpush1.xpose.msra.mxu0 0.0
    %166 = vmatprep.subr.mxu0 0.0
    %167 = vmatpush1.xpose.msra.mxu0 0.0
    %168 = vmatprep.subr.mxu0 0.0
    %169 = vmatpush1.xpose.msra.mxu0 0.0
    %170 = vmatprep.subr.mxu0 0.0
    %171 = vmatpush1.xpose.msra.mxu0 0.0
    %172 = vmatprep.mubr.f32.mxu0 0.0
    %173 = vmatmul.mubr.f32.gmra.mrb[0].mxu0 %v55
    %v174 = vpop.f32.mrb[0].mxu0
    %v175 = vadd.f32 %v46, %v174
    %v176 = vpop.f32.mrb[0].mxu0
    %177 = vmatprep.mubr.f32.mxu0 0.0
    %178 = vmatmul.mubr.f32.gmra.mrb[0].mxu0 %v58
    %v179 = vpop.f32.mrb[0].mxu0
    %v180 = vadd.f32 %v51, %v179
    %v181 = vpop.f32.mrb[0].mxu0
    %182 = vdwg.mxu0
    %v183 = vmax.f32 %v175, 0.0
    %v184 = vmax.f32 %v180, 0.0
    %v185 = vld [vmem:[%s3] sm:$0x1]
    %v186 = vld [vmem:[#allocation2] sm:$0x1]
    %188 = vset.pattern.permute.xlu0 0
    %189 = vperm.xlu0 %188, %v186
    %v190 = vpop.permute.xlu0 %189
    %v192 = vlaneseq
    %v193 = vshrl.u32 %v192, 7
    %v194 = vsub.s32 0, %v193
    %v195 = vrot.slane %v190, %v194
    %vm196 = vcmask 80896
    %v198 = vsel %vm196, %v185, 0
    %vm200 = vcmask 1041408
    %v202 = vsel %vm200, %v184, 0
    %204 = vmatprep.subr.mxu0 0.0
    %205 = vmatpush1.msra.mxu0 %v183
    %206 = vmatprep.subr.mxu0 0.0
    %207 = vmatpush1.msra.mxu0 %v202
    %208 = vmatprep.subr.mxu0 0.0
    %209 = vmatpush1.msra.mxu0 0.0
    %210 = vmatprep.subr.mxu0 0.0
    %211 = vmatpush1.msra.mxu0 0.0
    %212 = vmatprep.subr.mxu0 0.0
    %213 = vmatpush1.msra.mxu0 0.0
    %214 = vmatprep.subr.mxu0 0.0
    %215 = vmatpush1.msra.mxu0 0.0
    %216 = vmatprep.subr.mxu0 0.0
    %217 = vmatpush1.msra.mxu0 0.0
    %218 = vmatprep.subr.mxu0 0.0
    %219 = vmatpush1.msra.mxu0 0.0
    %220 = vmatprep.subr.mxu0 0.0
    %221 = vmatpush1.msra.mxu0 0.0
    %222 = vmatprep.subr.mxu0 0.0
    %223 = vmatpush1.msra.mxu0 0.0
    %224 = vmatprep.subr.mxu0 0.0
    %225 = vmatpush1.msra.mxu0 0.0
    %226 = vmatprep.subr.mxu0 0.0
    %227 = vmatpush1.msra.mxu0 0.0
    %228 = vmatprep.subr.mxu0 0.0
    %229 = vmatpush1.msra.mxu0 0.0
    %230 = vmatprep.subr.mxu0 0.0
    %231 = vmatpush1.msra.mxu0 0.0
    %232 = vmatprep.subr.mxu0 0.0
    %233 = vmatpush1.msra.mxu0 0.0
    %234 = vmatprep.subr.mxu0 0.0
    %235 = vmatpush1.msra.mxu0 0.0
    %236 = vmatprep.subr.mxu0 0.0
    %237 = vmatpush1.msra.mxu0 0.0
    %238 = vmatprep.subr.mxu0 0.0
    %239 = vmatpush1.msra.mxu0 0.0
    %240 = vmatprep.subr.mxu0 0.0
    %241 = vmatpush1.msra.mxu0 0.0
    %242 = vmatprep.subr.mxu0 0.0
    %243 = vmatpush1.msra.mxu0 0.0
    %244 = vmatprep.subr.mxu0 0.0
    %245 = vmatpush1.msra.mxu0 0.0
    %246 = vmatprep.subr.mxu0 0.0
    %247 = vmatpush1.msra.mxu0 0.0
    %248 = vmatprep.subr.mxu0 0.0
    %249 = vmatpush1.msra.mxu0 0.0
    %250 = vmatprep.subr.mxu0 0.0
    %251 = vmatpush1.msra.mxu0 0.0
    %252 = vmatprep.subr.mxu0 0.0
    %253 = vmatpush1.msra.mxu0 0.0
    %254 = vmatprep.subr.mxu0 0.0
    %255 = vmatpush1.msra.mxu0 0.0
    %256 = vmatprep.subr.mxu0 0.0
    %257 = vmatpush1.msra.mxu0 0.0
    %258 = vmatprep.subr.mxu0 0.0
    %259 = vmatpush1.msra.mxu0 0.0
    %260 = vmatprep.subr.mxu0 0.0
    %261 = vmatpush1.msra.mxu0 0.0
    %262 = vmatprep.subr.mxu0 0.0
    %263 = vmatpush1.msra.mxu0 0.0
    %264 = vmatprep.subr.mxu0 0.0
    %265 = vmatpush1.msra.mxu0 0.0
    %266 = vmatprep.subr.mxu0 0.0
    %267 = vmatpush1.msra.mxu0 0.0
    %268 = vmatprep.mubr.f32.mxu0 0.0
    %269 = vmatmul.mubr.f32.gmra.mrb[0].mxu0 %v198
    %v270 = vpop.f32.mrb[0].mxu0
    %v271 = vadd.f32 %v195, %v270
    %v272 = vpop.f32.mrb[0].mxu0
    %273 = vdwg.mxu0
    %274 = vst [vmem:[#allocation3] sm:$0x1] %v271
    // Predicated region
    $region22: #{tpu_custom_call.1} parent=1 // pred_check
      _
    $region23: #{tpu_custom_call.1} parent=1 // pred_check_branch
      %276 = sbr.rel (0) target = $region25
    $region24: #{tpu_custom_call.1} parent=1 // pred_region
      %s278 = ssub.s32 16, 16
      %279 = vsyncadd [#allocation4], %s278
      %s281 = sshll.u32 [#allocation3], 4
      %s282 = int_to_ptr.vmem [resolvable:$true] %s281
      %284 = dma.vmem_to_hbm [thread:$0]  %s282, 16, %s5, [#allocation4]
    $region25: #{tpu_custom_call.1} parent=1 // pred_fallthru
      _
    // Predicated region
    $region26: #{tpu_custom_call.1} parent=1 // pred_check
      _
    $region27: #{tpu_custom_call.1} parent=1 // pred_check_branch
      %286 = sbr.rel (0) target = $region29
    $region28: #{tpu_custom_call.1} parent=1 // pred_region
      %287 = dma.done [#allocation4], 16
    $region29: #{tpu_custom_call.1} parent=1 // pred_fallthru
      _
    %288 = vsyncpa [#allocation4], 1

</llo_original>
